<compile_context>
chip_gen: v6e
topology: v6e:2x2x1
jax: 0.10.0
libtpu: 0.0.40
codegen_flags: <defaults>
</compile_context>

<pallas_src>
import functools

import jax
import jax.numpy as jnp
from jax.experimental import pallas as pl
from jax.experimental.pallas import tpu as pltpu

NEG_INF = float("-inf")


def _round_up(x, m):
    return ((x + m - 1) // m) * m


def mlp_mask_softmax_kernel(xT_ref, w1_ref, b1_ref, w2_ref, b2_ref, w3_ref,
                            b3_ref, mask_ref, out_ref, *, alpha):
    # ---- vertex-independent MLP, transposed orientation: activations (H, N_pad),
    # ---- lane (fast) axis = nodes -> everything is lane-dense.
    h = jnp.dot(w1_ref[...], xT_ref[...], preferred_element_type=jnp.float32) + b1_ref[...]
    h = jnp.where(h > 0, h, alpha * h)                          # LeakyReLU
    h = jnp.dot(w2_ref[...], h, preferred_element_type=jnp.float32) + b2_ref[...]
    h = jnp.where(h > 0, h, alpha * h)                          # LeakyReLU
    logits = (jnp.dot(w3_ref[...], h, preferred_element_type=jnp.float32)
              + b3_ref[0])                                      # (1, N_pad); b3 = SMEM scalar

    # ---- batched mask + softmax: V_pad sublanes x N_pad lanes, one dense store ----
    z = logits + mask_ref[...]                                  # (V_pad, N_pad)
    zmax = jnp.max(z, axis=1, keepdims=True)
    e = jnp.exp(z - zmax)
    s = jnp.sum(e, axis=1, keepdims=True)
    out_ref[...] = e * pl.reciprocal(s, approx=True)            # EUP reciprocal, unmasked vst


def _build_mask(edge_index, vertices, n_nodes, n_pad, v_pad):
    """Dense additive mask (V_pad, N_pad): 0 for 1-hop in-neighbors of each vertex,
    -inf elsewhere (including the vertex itself); all zeros for the -1 sentinel.
    Pad lanes are -inf so they never contribute to the softmax."""
    V = vertices.shape[0]
    src = edge_index[0].astype(jnp.int32)                       # (E,)
    dst = edge_index[1].astype(jnp.int32)                       # (E,)
    node_ids = jnp.arange(n_nodes, dtype=jnp.int32)             # (N,)
    # neighbor[v, n] = exists edge (src=n, dst=vertices[v])
    neighbor = jnp.any(
        (src[None, None, :] == node_ids[None, :, None])
        & (dst[None, None, :] == vertices[:, None, None]),
        axis=-1)                                                 # (V, N)
    mask = jnp.where(neighbor, 0.0, NEG_INF).astype(jnp.float32)
    mask = jnp.where(node_ids[None, :] == vertices[:, None], NEG_INF, mask)
    mask = jnp.where(vertices[:, None] == -1, 0.0, mask)         # PyTorch "no mask" sentinel

    mask_pad = jnp.zeros((v_pad, n_pad), jnp.float32)
    mask_pad = mask_pad.at[:, n_nodes:].set(NEG_INF)             # kill pad lanes
    mask_pad = mask_pad.at[:V, :n_nodes].set(mask)
    return mask_pad


def mlp_forward_batched(params, x, edge_index, vertices, *, alpha):
    """Batched over query vertices: returns (V, N), one softmax row per vertex."""
    N, F = x.shape
    H = params["w1"].shape[0]
    vertices = jnp.atleast_1d(jnp.asarray(vertices, dtype=jnp.int32))
    V = vertices.shape[0]

    N_pad = max(128, _round_up(N, 128))                          # lane-dense node axis
    V_pad = max(8, _round_up(V, 8))                              # sublane-dense vertex axis

    xT_pad = jnp.zeros((F, N_pad), jnp.float32).at[:, :N].set(
        jnp.transpose(x).astype(jnp.float32))
    mask_pad = _build_mask(edge_index, vertices, N, N_pad, V_pad)

    vmem = pl.BlockSpec(memory_space=pltpu.MemorySpace.VMEM)     # whole array in VMEM
    smem = pl.BlockSpec(memory_space=pltpu.MemorySpace.SMEM)     # scalar in SMEM

    kernel = functools.partial(mlp_mask_softmax_kernel, alpha=alpha)
    out = pl.pallas_call(
        kernel,
        out_shape=jax.ShapeDtypeStruct((V_pad, N_pad), jnp.float32),
        in_specs=[vmem,                                          # xT      (F, N_pad)
                  vmem, vmem,                                    # w1, b1
                  vmem, vmem,                                    # w2, b2
                  vmem,                                          # w3
                  smem,                                          # b3 scalar
                  vmem],                                         # mask    (V_pad, N_pad)
        out_specs=vmem,
    )(xT_pad, params["w1"], params["b1"], params["w2"], params["b2"],
      params["w3"], params["b3"].reshape(1), mask_pad)
    return out[:V, :N]


def mlp_forward(params, x, edge_index, current_vertex, *, alpha):
    """Single-vertex API matching the PyTorch module: returns (N, 1)."""
    row = mlp_forward_batched(params, x, edge_index,
                              jnp.asarray([current_vertex], dtype=jnp.int32),
                              alpha=alpha)
    return row.reshape(-1, 1)


def init_params(key, in_features, hidden):
    # Weights kept in PyTorch nn.Linear (out_features, in_features) layout.
    k1, k2, k3, k4, k5, k6 = jax.random.split(key, 6)
    s1 = float(1.0 / jnp.sqrt(in_features))
    s2 = float(1.0 / jnp.sqrt(hidden))
    u = lambda k, shape, s: jax.random.uniform(k, shape, jnp.float32, -s, s)
    return {
        "w1": u(k1, (hidden, in_features), s1),
        "b1": u(k2, (hidden, 1), s1),
        "w2": u(k3, (hidden, hidden), s2),
        "b2": u(k4, (hidden, 1), s2),
        "w3": u(k5, (1, hidden), s2),
        "b3": u(k6, (1, 1), s2),
    }


def _ref_forward(params, x, edge_index, vertex, alpha):
    """Pure-JAX reference of the PyTorch module (for correctness checking)."""
    h = x @ params["w1"].T + params["b1"][:, 0]
    h = jnp.where(h > 0, h, alpha * h)
    h = h @ params["w2"].T + params["b2"][:, 0]
    h = jnp.where(h > 0, h, alpha * h)
    logits = h @ params["w3"].T + params["b3"][:, 0]             # (N, 1)
    if vertex == -1:
        z = logits
    else:
        N = x.shape[0]
        neighbor = jnp.any((edge_index[0][None, :] == jnp.arange(N)[:, None])
                           & (edge_index[1][None, :] == vertex), axis=1)
        mask = jnp.where(neighbor, 0.0, NEG_INF)
        mask = mask.at[vertex].set(NEG_INF)
        z = logits + mask[:, None]
    return jax.nn.softmax(z, axis=0)


if __name__ == "__main__":
    key = jax.random.PRNGKey(0)
    N = 16           # number of graph vertices
    F = 4            # input feature dim (LazyLinear infers this in PyTorch)
    HIDDEN = 32      # hidden_layer_size
    ALPHA = 0.01     # relu_alpha

    kx, kp = jax.random.split(key)
    x = jax.random.normal(kx, (N, F), dtype=jnp.float32)

    # Simple bidirectional ring graph: edges i <-> (i+1) mod N, E = 2N
    src = jnp.concatenate([jnp.arange(N), (jnp.arange(N) + 1) % N])
    dst = jnp.concatenate([(jnp.arange(N) + 1) % N, jnp.arange(N)])
    edge_index = jnp.stack([src, dst]).astype(jnp.int32)          # (2, 32)

    params = init_params(kp, F, HIDDEN)

    # Batched call: one kernel invocation, logits computed once, all 4 vertices'
    # mask + softmax vectorized across sublanes.
    vertices = jnp.asarray([3, -1, 0, 7], dtype=jnp.int32)
    out_batched = jax.block_until_ready(
        mlp_forward_batched(params, x, edge_index, vertices, alpha=ALPHA))
    assert out_batched.shape == (4, N)

    # Check against pure-JAX reference (tolerance loosened slightly to accommodate
    # the EUP approximate reciprocal in the softmax normalization).
    for idx in range(vertices.shape[0]):
        ref = _ref_forward(params, x, edge_index, int(vertices[idx]), ALPHA)[:, 0]
        assert jnp.allclose(out_batched[idx], ref, atol=2e-3, rtol=2e-3), (
            f"mismatch for vertex {int(vertices[idx])}")

    # Single-vertex API (PyTorch-shaped (N, 1) output).
    out_single = jax.block_until_ready(
        mlp_forward(params, x, edge_index, 3, alpha=ALPHA))
    assert out_single.shape == (N, 1)
    assert jnp.allclose(out_single[:, 0], out_batched[0], atol=1e-6)

    print("KERNEL_OK")
</pallas_src>

<mosaic_0001>
module attributes {stable_mosaic.version = 11 : i64} {
  func.func @mlp_mask_softmax_kernel(%arg0: memref<4x128xf32, #tpu.memory_space<vmem>>, %arg1: memref<32x4xf32, #tpu.memory_space<vmem>>, %arg2: memref<32x1xf32, #tpu.memory_space<vmem>>, %arg3: memref<32x32xf32, #tpu.memory_space<vmem>>, %arg4: memref<32x1xf32, #tpu.memory_space<vmem>>, %arg5: memref<1x32xf32, #tpu.memory_space<vmem>>, %arg6: memref<1xf32, #tpu.memory_space<smem>>, %arg7: memref<8x128xf32, #tpu.memory_space<vmem>>, %arg8: memref<8x128xf32, #tpu.memory_space<vmem>>) attributes {dimension_semantics = [], scalar_prefetch = 0 : i64, scratch_operands = 0 : i64, tpu.core_type = #tpu.core_type<tc>} {
    %c0 = arith.constant 0 : index
    %c0_0 = arith.constant 0 : index
    %0 = vector.load %arg1[%c0, %c0_0] : memref<32x4xf32, #tpu.memory_space<vmem>>, vector<32x4xf32>
    %c0_1 = arith.constant 0 : index
    %c0_2 = arith.constant 0 : index
    %1 = vector.load %arg0[%c0_1, %c0_2] : memref<4x128xf32, #tpu.memory_space<vmem>>, vector<4x128xf32>
    %cst = arith.constant dense<0.000000e+00> : vector<32x128xf32>
    %2 = tpu.matmul %0, %1, %cst {dimension_numbers = #tpu.dot_dimension_numbers<[1], [0], [0], [1], [0, 0, 1, 1], [], []>} : vector<32x4xf32>, vector<4x128xf32>, vector<32x128xf32> -> vector<32x128xf32>
    %c0_3 = arith.constant 0 : index
    %c0_4 = arith.constant 0 : index
    %3 = vector.load %arg2[%c0_3, %c0_4] : memref<32x1xf32, #tpu.memory_space<vmem>>, vector<32x1xf32>
    %4 = vector.broadcast %3 : vector<32x1xf32> to vector<32x128xf32>
    %5 = arith.addf %2, %4 : vector<32x128xf32>
    %cst_5 = arith.constant 0.000000e+00 : f32
    %6 = vector.broadcast %cst_5 : f32 to vector<32x128xf32>
    %7 = arith.cmpf ogt, %5, %6 : vector<32x128xf32>
    %cst_6 = arith.constant 0.00999999977 : f32
    %8 = vector.broadcast %cst_6 : f32 to vector<32x128xf32>
    %9 = arith.mulf %8, %5 : vector<32x128xf32>
    %10 = arith.select %7, %5, %9 : vector<32x128xi1>, vector<32x128xf32>
    %c0_7 = arith.constant 0 : index
    %c0_8 = arith.constant 0 : index
    %11 = vector.load %arg3[%c0_7, %c0_8] : memref<32x32xf32, #tpu.memory_space<vmem>>, vector<32x32xf32>
    %cst_9 = arith.constant dense<0.000000e+00> : vector<32x128xf32>
    %12 = tpu.matmul %11, %10, %cst_9 {dimension_numbers = #tpu.dot_dimension_numbers<[1], [0], [0], [1], [0, 0, 1, 1], [], []>} : vector<32x32xf32>, vector<32x128xf32>, vector<32x128xf32> -> vector<32x128xf32>
    %c0_10 = arith.constant 0 : index
    %c0_11 = arith.constant 0 : index
    %13 = vector.load %arg4[%c0_10, %c0_11] : memref<32x1xf32, #tpu.memory_space<vmem>>, vector<32x1xf32>
    %14 = vector.broadcast %13 : vector<32x1xf32> to vector<32x128xf32>
    %15 = arith.addf %12, %14 : vector<32x128xf32>
    %cst_12 = arith.constant 0.000000e+00 : f32
    %16 = vector.broadcast %cst_12 : f32 to vector<32x128xf32>
    %17 = arith.cmpf ogt, %15, %16 : vector<32x128xf32>
    %cst_13 = arith.constant 0.00999999977 : f32
    %18 = vector.broadcast %cst_13 : f32 to vector<32x128xf32>
    %19 = arith.mulf %18, %15 : vector<32x128xf32>
    %20 = arith.select %17, %15, %19 : vector<32x128xi1>, vector<32x128xf32>
    %c0_14 = arith.constant 0 : index
    %c0_15 = arith.constant 0 : index
    %21 = vector.load %arg5[%c0_14, %c0_15] : memref<1x32xf32, #tpu.memory_space<vmem>>, vector<1x32xf32>
    %cst_16 = arith.constant dense<0.000000e+00> : vector<1x128xf32>
    %22 = tpu.matmul %21, %20, %cst_16 {dimension_numbers = #tpu.dot_dimension_numbers<[1], [0], [0], [1], [0, 0, 1, 1], [], []>} : vector<1x32xf32>, vector<32x128xf32>, vector<1x128xf32> -> vector<1x128xf32>
    %c0_17 = arith.constant 0 : index
    %23 = memref.load %arg6[%c0_17] : memref<1xf32, #tpu.memory_space<smem>>
    %24 = vector.broadcast %23 : f32 to vector<1x128xf32>
    %25 = arith.addf %22, %24 : vector<1x128xf32>
    %c0_18 = arith.constant 0 : index
    %c0_19 = arith.constant 0 : index
    %26 = vector.load %arg7[%c0_18, %c0_19] : memref<8x128xf32, #tpu.memory_space<vmem>>, vector<8x128xf32>
    %27 = vector.broadcast %25 : vector<1x128xf32> to vector<8x128xf32>
    %28 = arith.addf %27, %26 : vector<8x128xf32>
    %cst_20 = arith.constant dense<0xFF800000> : vector<8xf32>
    %29 = vector.multi_reduction <maximumf>, %28, %cst_20 [1] : vector<8x128xf32> to vector<8xf32>
    %30 = vector.shape_cast %29 : vector<8xf32> to vector<8x1xf32>
    %31 = vector.broadcast %30 : vector<8x1xf32> to vector<8x128xf32>
    %32 = arith.subf %28, %31 : vector<8x128xf32>
    %33 = math.exp %32 : vector<8x128xf32>
    %cst_21 = arith.constant dense<0.000000e+00> : vector<8xf32>
    %34 = vector.multi_reduction <add>, %33, %cst_21 [1] : vector<8x128xf32> to vector<8xf32>
    %35 = vector.shape_cast %34 : vector<8xf32> to vector<8x1xf32>
    %36 = tpu.reciprocal %35 {approx = true} : vector<8x1xf32> -> vector<8x1xf32>
    %37 = vector.broadcast %36 : vector<8x1xf32> to vector<8x128xf32>
    %38 = arith.mulf %33, %37 : vector<8x128xf32>
    %c0_22 = arith.constant 0 : index
    %c0_23 = arith.constant 0 : index
    %39 = vector.load %arg8[%c0_22, %c0_23] : memref<8x128xf32, #tpu.memory_space<vmem>>, vector<8x128xf32>
    tpu.vector_store %arg8[%c0_22, %c0_23], %38 {strides = array<i32>} : memref<8x128xf32, #tpu.memory_space<vmem>>, vector<8x128xf32>,
    return
  }
}

</mosaic_0001>

<llo_original>
// kernel: tpu_custom_call.1
$region0: #{tpu_custom_call.1}
  #allocation0 [shape = 'u32[]', space=smem, size = 0x4, offset = 0x4, fixed_abs, tag = 'smem constant byte address 0x4 - core index']
  #allocation1 [shape = 'u32[144,128]{1,0:T(1,128)}', space=vmem, size = 0x12000, scoped, tag = 'internal scratch']
  #allocation2 [shape = 'f32[1]{0:T(128)S(6)}', space=smem, size = 0x200, scoped, tag = 'scoped memory for tpu_custom_call.1']
  %s0 = inlined_call_operand.vmem [shape: f32[4,128], index: 0, kind: input, shape index: {}]
  %s1 = inlined_call_operand.vmem [shape: f32[32,4], index: 1, kind: input, shape index: {}]
  %s2 = inlined_call_operand.vmem [shape: f32[32,1], index: 2, kind: input, shape index: {}]
  %s3 = inlined_call_operand.vmem [shape: f32[32,32], index: 3, kind: input, shape index: {}]
  %s4 = inlined_call_operand.vmem [shape: f32[32,1], index: 4, kind: input, shape index: {}]
  %s5 = inlined_call_operand.vmem [shape: f32[1,32], index: 5, kind: input, shape index: {}]
  %s6 = inlined_call_operand.<no memory space> [shape: f32[1], index: 6, kind: input, shape index: {}]
  %s7 = inlined_call_operand.vmem [shape: f32[8,128], index: 7, kind: input, shape index: {}]
  %s8 = inlined_call_operand.hbm [shape: f32[8,128], index: 8, kind: output, shape index: {}]
  %s9 = sld [smem:[#allocation0]]
  $region42: #{tpu_custom_call.1} parent=0
    _
  %s11 = ssub.s32 1, %s9
  %s12 = scalar_select 0, %s11, %s9
  %13 = sst [smem:[#allocation2]] %s6
  $region1: #{tpu_custom_call.1} parent=0
    #allocation3 [shape = 'u8[4096]{0}', space=vmem, size = 0x1000, scoped, tag = 'output window, operand 0, single buffered']
    #allocation4 [shape = 's32[1]{0}', space=sflag, size = 0x4, scoped, tag = 'scoped memory for tpu_custom_call.1']
    %14 = vsyncpa [#allocation4], 0
    // Predicated region
    $region2: #{tpu_custom_call.1} parent=1 // pred_check
      _
    $region3: #{tpu_custom_call.1} parent=1 // pred_check_branch
      %16 = sbr.rel (0) target = $region5
    $region4: #{tpu_custom_call.1} parent=1 // pred_region
      _
    $region5: #{tpu_custom_call.1} parent=1 // pred_fallthru
      _
    // Predicated region
    $region6: #{tpu_custom_call.1} parent=1 // pred_check
      _
    $region7: #{tpu_custom_call.1} parent=1 // pred_check_branch
      %18 = sbr.rel (0) target = $region9
    $region8: #{tpu_custom_call.1} parent=1 // pred_region
      _
    $region9: #{tpu_custom_call.1} parent=1 // pred_fallthru
      _
    // Predicated region
    $region10: #{tpu_custom_call.1} parent=1 // pred_check
      _
    $region11: #{tpu_custom_call.1} parent=1 // pred_check_branch
      %20 = sbr.rel (0) target = $region13
    $region12: #{tpu_custom_call.1} parent=1 // pred_region
      _
    $region13: #{tpu_custom_call.1} parent=1 // pred_fallthru
      _
    // Predicated region
    $region14: #{tpu_custom_call.1} parent=1 // pred_check
      _
    $region15: #{tpu_custom_call.1} parent=1 // pred_check_branch
      %22 = sbr.rel (0) target = $region17
    $region16: #{tpu_custom_call.1} parent=1 // pred_region
      _
    $region17: #{tpu_custom_call.1} parent=1 // pred_fallthru
      _
    // Predicated region
    $region18: #{tpu_custom_call.1} parent=1 // pred_check
      _
    $region19: #{tpu_custom_call.1} parent=1 // pred_check_branch
      %24 = sbr.rel (0) target = $region21
    $region20: #{tpu_custom_call.1} parent=1 // pred_region
      _
    $region21: #{tpu_custom_call.1} parent=1 // pred_fallthru
      _
    // Predicated region
    $region22: #{tpu_custom_call.1} parent=1 // pred_check
      _
    $region23: #{tpu_custom_call.1} parent=1 // pred_check_branch
      %26 = sbr.rel (0) target = $region25
    $region24: #{tpu_custom_call.1} parent=1 // pred_region
      _
    $region25: #{tpu_custom_call.1} parent=1 // pred_fallthru
      _
    // Predicated region
    $region26: #{tpu_custom_call.1} parent=1 // pred_check
      _
    $region27: #{tpu_custom_call.1} parent=1 // pred_check_branch
      %28 = sbr.rel (0) target = $region29
    $region28: #{tpu_custom_call.1} parent=1 // pred_region
      _
    $region29: #{tpu_custom_call.1} parent=1 // pred_fallthru
      _
    // Predicated region
    $region30: #{tpu_custom_call.1} parent=1 // pred_check
      _
    $region31: #{tpu_custom_call.1} parent=1 // pred_check_branch
      %30 = sbr.rel (0) target = $region33
    $region32: #{tpu_custom_call.1} parent=1 // pred_region
      _
    $region33: #{tpu_custom_call.1} parent=1 // pred_fallthru
      _
    %v31 = vld [vmem:[%s1] sm:$0xff]
    %v32 = vld [vmem:[%s1 + $0x8] sm:$0xff]
    %v33 = vld [vmem:[%s1 + $0x10] sm:$0xff]
    %v34 = vld [vmem:[%s1 + $0x18] sm:$0xff]
    %v35 = vld [vmem:[%s0] sm:$0xf]
    %v36 = vld [vmem:[%s2] sm:$0xff]
    %v37 = vld [vmem:[%s2 + $0x8] sm:$0xff]
    %v38 = vld [vmem:[%s2 + $0x10] sm:$0xff]
    %v39 = vld [vmem:[%s2 + $0x18] sm:$0xff]
    %41 = vset.pattern.permute.xlu0 0
    %42 = vperm.xlu0 %41, %v36
    %v43 = vpop.permute.xlu0 %42
    %46 = vset.pattern.permute.xlu0 0
    %47 = vperm.xlu0 %46, %v37
    %v48 = vpop.permute.xlu0 %47
    %51 = vset.pattern.permute.xlu0 0
    %52 = vperm.xlu0 %51, %v38
    %v53 = vpop.permute.xlu0 %52
    %56 = vset.pattern.permute.xlu0 0
    %57 = vperm.xlu0 %56, %v39
    %v58 = vpop.permute.xlu0 %57
    %vm60 = vcmask 31744
    %v62 = vsel %vm60, %v31, 0
    %v65 = vsel %vm60, %v32, 0
    %v68 = vsel %vm60, %v33, 0
    %v71 = vsel %vm60, %v34, 0
    %vm73 = vcmask 1043456
    %v75 = vsel %vm73, %v35, 0
    %77 = vmatprep.subr.mxu0 0.0
    %78 = vmatpush1.msra.mxu0 0.0
    %79 = vmatprep.subr.mxu0 0.0
    %80 = vmatpush1.msra.mxu0 0.0
    %81 = vmatprep.subr.mxu0 0.0
    %82 = vmatpush1.msra.mxu0 0.0
    %83 = vmatprep.subr.mxu0 0.0
    %84 = vmatpush1.msra.mxu0 0.0
    %85 = vmatprep.subr.mxu0 0.0
    %86 = vmatpush1.msra.mxu0 0.0
    %87 = vmatprep.subr.mxu0 0.0
    %88 = vmatpush1.msra.mxu0 0.0
    %89 = vmatprep.subr.mxu0 0.0
    %90 = vmatpush1.msra.mxu0 0.0
    %91 = vmatprep.subr.mxu0 0.0
    %92 = vmatpush1.msra.mxu0 0.0
    %93 = vmatprep.subr.mxu0 0.0
    %94 = vmatpush1.msra.mxu0 0.0
    %95 = vmatprep.subr.mxu0 0.0
    %96 = vmatpush1.msra.mxu0 0.0
    %97 = vmatprep.subr.mxu0 0.0
    %98 = vmatpush1.msra.mxu0 0.0
    %99 = vmatprep.subr.mxu0 0.0
    %100 = vmatpush1.msra.mxu0 0.0
    %101 = vmatprep.subr.mxu0 0.0
    %102 = vmatpush1.msra.mxu0 0.0
    %103 = vmatprep.subr.mxu0 0.0
    %104 = vmatpush1.msra.mxu0 0.0
    %105 = vmatprep.subr.mxu0 0.0
    %106 = vmatpush1.msra.mxu0 0.0
    %107 = vmatprep.subr.mxu0 0.0
    %108 = vmatpush1.msra.mxu0 %v75
    %109 = vmatprep.subr.mxu0 0.0
    %110 = vmatpush2.msra.mxu0 0.0
    %111 = vmatprep.subr.mxu0 0.0
    %112 = vmatpush2.msra.mxu0 0.0
    %113 = vmatprep.subr.mxu0 0.0
    %114 = vmatpush2.msra.mxu0 0.0
    %115 = vmatprep.subr.mxu0 0.0
    %116 = vmatpush2.msra.mxu0 0.0
    %117 = vmatprep.subr.mxu0 0.0
    %118 = vmatpush2.msra.mxu0 0.0
    %119 = vmatprep.subr.mxu0 0.0
    %120 = vmatpush2.msra.mxu0 0.0
    %121 = vmatprep.subr.mxu0 0.0
    %122 = vmatpush2.msra.mxu0 0.0
    %123 = vmatprep.subr.mxu0 0.0
    %124 = vmatpush2.msra.mxu0 0.0
    %125 = vmatprep.subr.mxu0 0.0
    %126 = vmatpush2.msra.mxu0 0.0
    %127 = vmatprep.subr.mxu0 0.0
    %128 = vmatpush2.msra.mxu0 0.0
    %129 = vmatprep.subr.mxu0 0.0
    %130 = vmatpush2.msra.mxu0 0.0
    %131 = vmatprep.subr.mxu0 0.0
    %132 = vmatpush2.msra.mxu0 0.0
    %133 = vmatprep.subr.mxu0 0.0
    %134 = vmatpush2.msra.mxu0 0.0
    %135 = vmatprep.subr.mxu0 0.0
    %136 = vmatpush2.msra.mxu0 0.0
    %137 = vmatprep.subr.mxu0 0.0
    %138 = vmatpush2.msra.mxu0 0.0
    %139 = vmatprep.subr.mxu0 0.0
    %140 = vmatpush2.msra.mxu0 0.0
    %141 = vmatprep.mubr.f32.mxu0 0.0
    %142 = vmatmul.mubr.f32.gmra.mxu0 %v62
    %v143 = vpop.f32.mrf.mxu0
    %v144 = vadd.f32 %v43, %v143
    %v145 = vpop.f32.mrf.mxu0
    %146 = vmatprep.mubr.f32.mxu0 0.0
    %147 = vmatmul.mubr.f32.gmra.mxu0 %v65
    %v148 = vpop.f32.mrf.mxu0
    %v149 = vadd.f32 %v48, %v148
    %v150 = vpop.f32.mrf.mxu0
    %151 = vmatprep.mubr.f32.mxu0 0.0
    %152 = vmatmul.mubr.f32.gmra.mxu0 %v68
    %v153 = vpop.f32.mrf.mxu0
    %v154 = vadd.f32 %v53, %v153
    %v155 = vpop.f32.mrf.mxu0
    %156 = vmatprep.mubr.f32.mxu0 0.0
    %157 = vmatmul.mubr.f32.gmra.mxu0 %v71
    %v158 = vpop.f32.mrf.mxu0
    %v159 = vadd.f32 %v58, %v158
    %v160 = vpop.f32.mrf.mxu0
    %161 = vdwg.mxu0
    %vm162 = vcmp.gt.f32.partialorder %v144, 0.0
    %vm163 = vcmp.gt.f32.partialorder %v149, 0.0
    %vm164 = vcmp.gt.f32.partialorder %v154, 0.0
    %vm165 = vcmp.gt.f32.partialorder %v159, 0.0
    %v166 = vmul.f32 %v144, 0.01
    %v167 = vmul.f32 %v149, 0.01
    %v168 = vmul.f32 %v154, 0.01
    %v169 = vmul.f32 %v159, 0.01
    %v170 = vsel %vm162, %v144, %v166
    %v171 = vsel %vm163, %v149, %v167
    %v172 = vsel %vm164, %v154, %v168
    %v173 = vsel %vm165, %v159, %v169
    %v174 = vld [vmem:[%s3] sm:$0xff]
    %v175 = vld [vmem:[%s3 + $0x8] sm:$0xff]
    %v176 = vld [vmem:[%s3 + $0x10] sm:$0xff]
    %v177 = vld [vmem:[%s3 + $0x18] sm:$0xff]
    %v178 = vld [vmem:[%s4] sm:$0xff]
    %v179 = vld [vmem:[%s4 + $0x8] sm:$0xff]
    %v180 = vld [vmem:[%s4 + $0x10] sm:$0xff]
    %v181 = vld [vmem:[%s4 + $0x18] sm:$0xff]
    %183 = vset.pattern.permute.xlu0 0
    %184 = vperm.xlu0 %183, %v178
    %v185 = vpop.permute.xlu0 %184
    %188 = vset.pattern.permute.xlu0 0
    %189 = vperm.xlu0 %188, %v179
    %v190 = vpop.permute.xlu0 %189
    %193 = vset.pattern.permute.xlu0 0
    %194 = vperm.xlu0 %193, %v180
    %v195 = vpop.permute.xlu0 %194
    %198 = vset.pattern.permute.xlu0 0
    %199 = vperm.xlu0 %198, %v181
    %v200 = vpop.permute.xlu0 %199
    %vm202 = vcmask 261120
    %v204 = vsel %vm202, %v174, 0
    %v207 = vsel %vm202, %v175, 0
    %v210 = vsel %vm202, %v176, 0
    %v213 = vsel %vm202, %v177, 0
    %215 = vmatprep.subr.mxu0 0.0
    %216 = vmatpush1.msra.mxu0 0.0
    %217 = vmatprep.subr.mxu0 0.0
    %218 = vmatpush1.msra.mxu0 0.0
    %219 = vmatprep.subr.mxu0 0.0
    %220 = vmatpush1.msra.mxu0 0.0
    %221 = vmatprep.subr.mxu0 0.0
    %222 = vmatpush1.msra.mxu0 0.0
    %223 = vmatprep.subr.mxu0 0.0
    %224 = vmatpush1.msra.mxu0 0.0
    %225 = vmatprep.subr.mxu0 0.0
    %226 = vmatpush1.msra.mxu0 0.0
    %227 = vmatprep.subr.mxu0 0.0
    %228 = vmatpush1.msra.mxu0 0.0
    %229 = vmatprep.subr.mxu0 0.0
    %230 = vmatpush1.msra.mxu0 0.0
    %231 = vmatprep.subr.mxu0 0.0
    %232 = vmatpush1.msra.mxu0 0.0
    %233 = vmatprep.subr.mxu0 0.0
    %234 = vmatpush1.msra.mxu0 0.0
    %235 = vmatprep.subr.mxu0 0.0
    %236 = vmatpush1.msra.mxu0 0.0
    %237 = vmatprep.subr.mxu0 0.0
    %238 = vmatpush1.msra.mxu0 0.0
    %239 = vmatprep.subr.mxu0 0.0
    %240 = vmatpush1.msra.mxu0 %v173
    %241 = vmatprep.subr.mxu0 0.0
    %242 = vmatpush1.msra.mxu0 %v172
    %243 = vmatprep.subr.mxu0 0.0
    %244 = vmatpush1.msra.mxu0 %v171
    %245 = vmatprep.subr.mxu0 0.0
    %246 = vmatpush1.msra.mxu0 %v170
    %247 = vmatprep.subr.mxu0 0.0
    %248 = vmatpush2.msra.mxu0 0.0
    %249 = vmatprep.subr.mxu0 0.0
    %250 = vmatpush2.msra.mxu0 0.0
    %251 = vmatprep.subr.mxu0 0.0
    %252 = vmatpush2.msra.mxu0 0.0
    %253 = vmatprep.subr.mxu0 0.0
    %254 = vmatpush2.msra.mxu0 0.0
    %255 = vmatprep.subr.mxu0 0.0
    %256 = vmatpush2.msra.mxu0 0.0
    %257 = vmatprep.subr.mxu0 0.0
    %258 = vmatpush2.msra.mxu0 0.0
    %259 = vmatprep.subr.mxu0 0.0
    %260 = vmatpush2.msra.mxu0 0.0
    %261 = vmatprep.subr.mxu0 0.0
    %262 = vmatpush2.msra.mxu0 0.0
    %263 = vmatprep.subr.mxu0 0.0
    %264 = vmatpush2.msra.mxu0 0.0
    %265 = vmatprep.subr.mxu0 0.0
    %266 = vmatpush2.msra.mxu0 0.0
    %267 = vmatprep.subr.mxu0 0.0
    %268 = vmatpush2.msra.mxu0 0.0
    %269 = vmatprep.subr.mxu0 0.0
    %270 = vmatpush2.msra.mxu0 0.0
    %271 = vmatprep.subr.mxu0 0.0
    %272 = vmatpush2.msra.mxu0 0.0
    %273 = vmatprep.subr.mxu0 0.0
    %274 = vmatpush2.msra.mxu0 0.0
    %275 = vmatprep.subr.mxu0 0.0
    %276 = vmatpush2.msra.mxu0 0.0
    %277 = vmatprep.subr.mxu0 0.0
    %278 = vmatpush2.msra.mxu0 0.0
    %279 = vmatprep.mubr.f32.mxu0 0.0
    %280 = vmatmul.mubr.f32.gmra.mxu0 %v204
    %v281 = vpop.f32.mrf.mxu0
    %v282 = vadd.f32 %v185, %v281
    %v283 = vpop.f32.mrf.mxu0
    %284 = vmatprep.mubr.f32.mxu0 0.0
    %285 = vmatmul.mubr.f32.gmra.mxu0 %v207
    %v286 = vpop.f32.mrf.mxu0
    %v287 = vadd.f32 %v190, %v286
    %v288 = vpop.f32.mrf.mxu0
    %289 = vmatprep.mubr.f32.mxu0 0.0
    %290 = vmatmul.mubr.f32.gmra.mxu0 %v210
    %v291 = vpop.f32.mrf.mxu0
    %v292 = vadd.f32 %v195, %v291
    %v293 = vpop.f32.mrf.mxu0
    %294 = vmatprep.mubr.f32.mxu0 0.0
    %295 = vmatmul.mubr.f32.gmra.mxu0 %v213
    %v296 = vpop.f32.mrf.mxu0
    %v297 = vadd.f32 %v200, %v296
    %v298 = vpop.f32.mrf.mxu0
    %299 = vdwg.mxu0
    %vm300 = vcmp.gt.f32.partialorder %v282, 0.0
    %vm301 = vcmp.gt.f32.partialorder %v287, 0.0
    %vm302 = vcmp.gt.f32.partialorder %v292, 0.0
    %vm303 = vcmp.gt.f32.partialorder %v297, 0.0
    %v304 = vmul.f32 %v282, 0.01
    %v305 = vmul.f32 %v287, 0.01
    %v306 = vmul.f32 %v292, 0.01
    %v307 = vmul.f32 %v297, 0.01
    %v308 = vsel %vm300, %v282, %v304
    %v309 = vsel %vm301, %v287, %v305
    %v310 = vsel %vm302, %v292, %v306
    %v311 = vsel %vm303, %v297, %v307
    %v312 = vld [vmem:[%s5] sm:$0x1]
    %s313 = sld [smem:[#allocation2]]
    %v314 = vstv %s313
    %v316 = vsel %vm202, %v312, 0
    %318 = vmatprep.subr.mxu0 0.0
    %319 = vmatpush1.msra.mxu0 0.0
    %320 = vmatprep.subr.mxu0 0.0
    %321 = vmatpush1.msra.mxu0 0.0
    %322 = vmatprep.subr.mxu0 0.0
    %323 = vmatpush1.msra.mxu0 0.0
    %324 = vmatprep.subr.mxu0 0.0
    %325 = vmatpush1.msra.mxu0 0.0
    %326 = vmatprep.subr.mxu0 0.0
    %327 = vmatpush1.msra.mxu0 0.0
    %328 = vmatprep.subr.mxu0 0.0
    %329 = vmatpush1.msra.mxu0 0.0
    %330 = vmatprep.subr.mxu0 0.0
    %331 = vmatpush1.msra.mxu0 0.0
    %332 = vmatprep.subr.mxu0 0.0
    %333 = vmatpush1.msra.mxu0 0.0
    %334 = vmatprep.subr.mxu0 0.0
    %335 = vmatpush1.msra.mxu0 0.0
    %336 = vmatprep.subr.mxu0 0.0
    %337 = vmatpush1.msra.mxu0 0.0
    %338 = vmatprep.subr.mxu0 0.0
    %339 = vmatpush1.msra.mxu0 0.0
    %340 = vmatprep.subr.mxu0 0.0
    %341 = vmatpush1.msra.mxu0 0.0
    %342 = vmatprep.subr.mxu0 0.0
    %343 = vmatpush1.msra.mxu0 %v311
    %344 = vmatprep.subr.mxu0 0.0
    %345 = vmatpush1.msra.mxu0 %v310
    %346 = vmatprep.subr.mxu0 0.0
    %347 = vmatpush1.msra.mxu0 %v309
    %348 = vmatprep.subr.mxu0 0.0
    %349 = vmatpush1.msra.mxu0 %v308
    %350 = vmatprep.subr.mxu0 0.0
    %351 = vmatpush2.msra.mxu0 0.0
    %352 = vmatprep.subr.mxu0 0.0
    %353 = vmatpush2.msra.mxu0 0.0
    %354 = vmatprep.subr.mxu0 0.0
    %355 = vmatpush2.msra.mxu0 0.0
    %356 = vmatprep.subr.mxu0 0.0
    %357 = vmatpush2.msra.mxu0 0.0
    %358 = vmatprep.subr.mxu0 0.0
    %359 = vmatpush2.msra.mxu0 0.0
    %360 = vmatprep.subr.mxu0 0.0
    %361 = vmatpush2.msra.mxu0 0.0
    %362 = vmatprep.subr.mxu0 0.0
    %363 = vmatpush2.msra.mxu0 0.0
    %364 = vmatprep.subr.mxu0 0.0
    %365 = vmatpush2.msra.mxu0 0.0
    %366 = vmatprep.subr.mxu0 0.0
    %367 = vmatpush2.msra.mxu0 0.0
    %368 = vmatprep.subr.mxu0 0.0
    %369 = vmatpush2.msra.mxu0 0.0
    %370 = vmatprep.subr.mxu0 0.0
    %371 = vmatpush2.msra.mxu0 0.0
    %372 = vmatprep.subr.mxu0 0.0
    %373 = vmatpush2.msra.mxu0 0.0
    %374 = vmatprep.subr.mxu0 0.0
    %375 = vmatpush2.msra.mxu0 0.0
    %376 = vmatprep.subr.mxu0 0.0
    %377 = vmatpush2.msra.mxu0 0.0
    %378 = vmatprep.subr.mxu0 0.0
    %379 = vmatpush2.msra.mxu0 0.0
    %380 = vmatprep.subr.mxu0 0.0
    %381 = vmatpush2.msra.mxu0 0.0
    %382 = vmatprep.mubr.f32.mxu0 0.0
    %383 = vmatmul.mubr.f32.gmra.mxu0 %v316
    %v384 = vpop.f32.mrf.mxu0
    %v385 = vadd.f32 %v314, %v384
    %v386 = vpop.f32.mrf.mxu0
    %387 = vdwg.mxu0
    %v388 = vld [vmem:[%s7] sm:$0xff]
    %v389 = vlaneseq
    %v390 = vshrl.u32 %v389, 7
    %v391 = vsub.s32 0, %v390
    %v392 = vrot.slane %v385, %v391
    %v393 = vadd.f32 %v392, %v388
    %394 = vmax.xlane.f32.xlu0 %v393
    %v395 = vpop.xlane.xlu0 %394
    %v396 = vsub.f32 %v393, %v395
    %v397 = vmul.f32 %v396, 1.442695
    %v398 = vpow.pop %v397
    %399 = vadd.xlane.f32.xlu0 %v398
    %v400 = vpop.xlane.xlu0 %399
    %v401 = vrcp.pop %v400
    %v402 = vmul.f32 %v398, %v401
    %403 = vst [vmem:[#allocation3] sm:$0xff] %v402
    // Predicated region
    $region34: #{tpu_custom_call.1} parent=1 // pred_check
      _
    $region35: #{tpu_custom_call.1} parent=1 // pred_check_branch
      %405 = sbr.rel (0) target = $region37
    $region36: #{tpu_custom_call.1} parent=1 // pred_region
      %s407 = ssub.s32 128, 128
      %408 = vsyncadd [#allocation4], %s407
      %s410 = sshll.u32 [#allocation3], 4
      %s411 = int_to_ptr.vmem [resolvable:$true] %s410
      %413 = dma.vmem_to_hbm [thread:$0]  %s411, 128, %s8, [#allocation4]
    $region37: #{tpu_custom_call.1} parent=1 // pred_fallthru
      _
    // Predicated region
    $region38: #{tpu_custom_call.1} parent=1 // pred_check
      _
    $region39: #{tpu_custom_call.1} parent=1 // pred_check_branch
      %415 = sbr.rel (0) target = $region41
    $region40: #{tpu_custom_call.1} parent=1 // pred_region
      %416 = dma.done [#allocation4], 128
    $region41: #{tpu_custom_call.1} parent=1 // pred_fallthru
      _
    %417 = vsyncpa [#allocation4], 1

</llo_original>
